<compile_context>
chip_gen: v5e
topology: v5e:2x2
jax: 0.10.0
libtpu: 0.0.40
codegen_flags: <defaults>
</compile_context>

<pallas_src>
import jax
import jax.numpy as jnp
from jax.experimental import pallas as pl
from jax.experimental.pallas import tpu as pltpu


# ------------------------------ fused kernel ------------------------------- #

def _deconv_block_kernel(x_ref, w_ref, scale_ref, bias_ref, o_ref):
    """x_ref:     (TM, K)    bf16 im2col rows (9 shifted copies of padded x+ones)
       w_ref:     (K, 4*C)   bf16 composed deconv∘conv weight
       scale_ref: (1, 4*C)   f32 folded BatchNorm scale (tiled over parity groups)
       bias_ref:  (1, 4*C)   f32 folded conv-bias + BatchNorm shift (tiled)
       o_ref:     (TM, 4*C)  f32 output parity planes packed along lanes
    """
    acc = jnp.dot(x_ref[...], w_ref[...], preferred_element_type=jnp.float32)
    o_ref[...] = jnp.maximum(acc * scale_ref[...] + bias_ref[...], 0.0).astype(o_ref.dtype)


# --------------------------------- wrapper --------------------------------- #

def deconv_block_forward(x_nchw, params, *, eps=1e-5):
    """Equivalent of DeconvBlock.forward (inference-mode BatchNorm)."""
    B, Cin, H, W = x_nchw.shape
    deconv_w = params["deconv_w"]           # (Cin, Cout, 2, 2)  PyTorch ConvTranspose2d layout
    deconv_b = params["deconv_b"]           # (Cout,)
    conv_w = params["conv_w"]               # (Cout, Cout, 3, 3) PyTorch Conv2d layout
    conv_b = params["conv_b"]               # (Cout,)
    Cout = conv_w.shape[0]

    Cin_aug = Cin + 1                       # + "ones" channel carrying the masked deconv bias
    Kp = ((Cin_aug + 7) // 8) * 8           # per-shift channel stride (sublane aligned)
    K = 9 * Kp                              # composed contraction dim
    N = 4 * Cout                            # 4 output-parity groups packed along lanes

    # ---- compose (ConvTranspose2d k2s2) ∘ (Conv2d k3 p1) into one matrix ----
    # Output pixel (2i+oy, 2j+ox), conv tap (dy,dx) reads deconv parity plane
    # p=(oy+dy)%2, q=(ox+dx)%2 at low-res position (i+sy, j+sx) with
    # sy=(oy+dy)//2, sx=(ox+dx)//2; values outside the image (incl. the deconv
    # bias) are zero -> handled by the shifted/masked ones channel.
    # NOTE: in practice this composition would be precomputed once, not per call.
    w_blocks = [[jnp.zeros((Cin_aug, Cout), jnp.float32) for _ in range(4)]
                for _ in range(9)]
    for oy in (0, 1):
        for ox in (0, 1):
            g = oy * 2 + ox
            for dy in (-1, 0, 1):
                m = oy + dy
                p, sy = m % 2, m // 2
                for dx in (-1, 0, 1):
                    n = ox + dx
                    q, sx = n % 2, n // 2
                    s = (sy + 1) * 3 + (sx + 1)
                    cw_tap = conv_w[:, :, dy + 1, dx + 1]        # (Cout, Cmid)
                    wd_pq = deconv_w[:, :, p, q]                 # (Cin,  Cmid)
                    blk = jnp.concatenate(
                        [wd_pq @ cw_tap.T,                       # x channels
                         (deconv_b @ cw_tap.T)[None, :]],        # ones channel
                        axis=0)                                  # (Cin_aug, Cout)
                    w_blocks[s][g] = w_blocks[s][g] + blk
    w_all = jnp.concatenate(
        [jnp.pad(jnp.concatenate(w_blocks[s], axis=1),           # (Cin_aug, 4*Cout)
                 ((0, Kp - Cin_aug), (0, 0)))                    # pad channels to Kp
         for s in range(9)], axis=0)                             # (K, 4*Cout)

    # ---- im2col over the LOW-RES input: 9 shifted/zero-masked copies ----
    x_cl = jnp.transpose(x_nchw, (0, 2, 3, 1))                   # (B, H, W, Cin)
    ones = jnp.ones((B, H, W, 1), x_cl.dtype)
    x_aug = jnp.concatenate([x_cl, ones], axis=-1)
    x_aug = jnp.pad(x_aug, ((0, 0), (0, 0), (0, 0), (0, Kp - Cin_aug)))
    x_sp = jnp.pad(x_aug, ((0, 0), (1, 1), (1, 1), (0, 0)))      # spatial zero halo
    cols = []
    for sy in (-1, 0, 1):
        for sx in (-1, 0, 1):
            cols.append(x_sp[:, 1 + sy:1 + sy + H, 1 + sx:1 + sx + W, :])
    x_im2col = jnp.concatenate(cols, axis=-1).reshape(B * H * W, K)

    # ---- fold conv bias + inference BatchNorm into scale / bias ----
    bn_scale = params["bn_gamma"] / jnp.sqrt(params["bn_var"] + eps)
    scale = jnp.tile(bn_scale, 4).reshape(1, N)
    bias = jnp.tile((conv_b - params["bn_mean"]) * bn_scale + params["bn_beta"],
                    4).reshape(1, N)

    # bf16 matmul operands (f32 accumulation + f32 epilogue in-kernel).
    x_bf = x_im2col.astype(jnp.bfloat16)
    w_bf = w_all.astype(jnp.bfloat16)

    # Batch folded into the matmul row dim; 2-way row-block grid -> both v7x
    # TensorCores busy, cheap 2-step loop with a full-height matmul on v5e/v6e.
    M = B * H * W
    TM = 256 if (M % 256 == 0) else M
    grid = (M // TM,)

    out_flat = pl.pallas_call(
        _deconv_block_kernel,
        out_shape=jax.ShapeDtypeStruct((M, N), jnp.float32),
        grid=grid,
        in_specs=[
            pl.BlockSpec((TM, K), lambda i: (i, 0)),
            pl.BlockSpec((K, N), lambda i: (0, 0)),
            pl.BlockSpec((1, N), lambda i: (0, 0)),
            pl.BlockSpec((1, N), lambda i: (0, 0)),
        ],
        out_specs=pl.BlockSpec((TM, N), lambda i: (i, 0)),
        compiler_params=pltpu.CompilerParams(
            dimension_semantics=("parallel",)),
    )(x_bf, w_bf, scale, bias)

    # Depth-to-space (parity planes -> interleaved pixels) + NCHW: pure layout
    # plumbing on the lane-dense kernel output, left to XLA.
    out = out_flat.reshape(B, H, W, 2, 2, Cout)
    out = jnp.transpose(out, (0, 1, 3, 2, 4, 5)).reshape(B, 2 * H, 2 * W, Cout)
    return jnp.transpose(out, (0, 3, 1, 2))


# ----------------------- pure-JAX reference (for check) --------------------- #

def reference_forward(x_nchw, params, *, eps=1e-5):
    dw, db = params["deconv_w"], params["deconv_b"]
    cw, cb = params["conv_w"], params["conv_b"]
    B, Cin, H, W = x_nchw.shape
    Cout = cw.shape[0]
    # ConvTranspose2d(k=2, s=2, p=0): per-pixel linear + depth-to-space
    t = jnp.einsum("bchw,cdpq->bdhpwq", x_nchw, dw)
    y = t.reshape(B, Cout, 2 * H, 2 * W) + db[None, :, None, None]
    # Conv2d(k=3, s=1, p=1)
    yp = jnp.pad(y, ((0, 0), (0, 0), (1, 1), (1, 1)))
    z = jax.lax.conv_general_dilated(yp, cw, (1, 1), "VALID",
                                     dimension_numbers=("NCHW", "OIHW", "NCHW"))
    z = z + cb[None, :, None, None]
    # BatchNorm2d (inference) + ReLU
    s = params["bn_gamma"] / jnp.sqrt(params["bn_var"] + eps)
    z = (z - params["bn_mean"][None, :, None, None]) * s[None, :, None, None] \
        + params["bn_beta"][None, :, None, None]
    return jnp.maximum(z, 0.0)


# ----------------------------------- main ----------------------------------- #

if __name__ == "__main__":
    B, Cin, Cout, H, W = 2, 4, 32, 16, 16
    key = jax.random.PRNGKey(0)
    ks = jax.random.split(key, 9)

    x = jax.random.normal(ks[0], (B, Cin, H, W), dtype=jnp.float32)
    params = {
        "deconv_w": 0.2 * jax.random.normal(ks[1], (Cin, Cout, 2, 2), jnp.float32),
        "deconv_b": 0.1 * jax.random.normal(ks[2], (Cout,), jnp.float32),
        "conv_w":   0.1 * jax.random.normal(ks[3], (Cout, Cout, 3, 3), jnp.float32),
        "conv_b":   0.1 * jax.random.normal(ks[4], (Cout,), jnp.float32),
        "bn_gamma": 1.0 + 0.1 * jax.random.normal(ks[5], (Cout,), jnp.float32),
        "bn_beta":  0.1 * jax.random.normal(ks[6], (Cout,), jnp.float32),
        "bn_mean":  0.1 * jax.random.normal(ks[7], (Cout,), jnp.float32),
        "bn_var":   1.0 + 0.5 * jax.random.uniform(ks[8], (Cout,), jnp.float32),
    }

    fwd = jax.jit(lambda inp: deconv_block_forward(inp, params))
    out = fwd(x)
    jax.block_until_ready(out)

    assert out.shape == (B, Cout, 2 * H, 2 * W), out.shape
    assert out.dtype == jnp.float32
    assert bool(jnp.all(jnp.isfinite(out)))

    ref = reference_forward(x, params)
    max_err = float(jnp.max(jnp.abs(out - ref)))
    assert max_err < 5e-2, f"mismatch vs reference: max abs err {max_err}"

    print("KERNEL_OK")
</pallas_src>

<mosaic_0001>
module attributes {stable_mosaic.version = 11 : i64} {
  func.func @_deconv_block_kernel(%arg0: i32, %arg1: memref<256x72xbf16, #tpu.memory_space<vmem>>, %arg2: memref<72x128xbf16, #tpu.memory_space<vmem>>, %arg3: memref<1x128xf32, #tpu.memory_space<vmem>>, %arg4: memref<1x128xf32, #tpu.memory_space<vmem>>, %arg5: memref<256x128xf32, #tpu.memory_space<vmem>>) attributes {dimension_semantics = [#tpu.dimension_semantics<parallel>], iteration_bounds = array<i64: 2>, scalar_prefetch = 0 : i64, scratch_operands = 0 : i64, tpu.core_type = #tpu.core_type<tc>, window_params = [{transform_indices = @transform_0, window_bounds = array<i64: 256, 72>}, {pipeline_mode = #tpu.pipeline_mode<synchronous>, transform_indices = @transform_1, window_bounds = array<i64: 72, 128>}, {pipeline_mode = #tpu.pipeline_mode<synchronous>, transform_indices = @transform_2, window_bounds = array<i64: 1, 128>}, {pipeline_mode = #tpu.pipeline_mode<synchronous>, transform_indices = @transform_3, window_bounds = array<i64: 1, 128>}, {transform_indices = @transform_4, window_bounds = array<i64: 256, 128>}]} {
    %c0 = arith.constant 0 : index
    %c0_0 = arith.constant 0 : index
    %0 = vector.load %arg1[%c0, %c0_0] : memref<256x72xbf16, #tpu.memory_space<vmem>>, vector<256x72xbf16>
    %c0_1 = arith.constant 0 : index
    %c0_2 = arith.constant 0 : index
    %1 = vector.load %arg2[%c0_1, %c0_2] : memref<72x128xbf16, #tpu.memory_space<vmem>>, vector<72x128xbf16>
    %cst = arith.constant dense<0.000000e+00> : vector<256x128xf32>
    %2 = tpu.matmul %0, %1, %cst {dimension_numbers = #tpu.dot_dimension_numbers<[1], [0], [0], [1], [0, 0, 1, 1], [], []>} : vector<256x72xbf16>, vector<72x128xbf16>, vector<256x128xf32> -> vector<256x128xf32>
    %c0_3 = arith.constant 0 : index
    %c0_4 = arith.constant 0 : index
    %3 = vector.load %arg3[%c0_3, %c0_4] : memref<1x128xf32, #tpu.memory_space<vmem>>, vector<1x128xf32>
    %4 = vector.broadcast %3 : vector<1x128xf32> to vector<256x128xf32>
    %5 = arith.mulf %2, %4 : vector<256x128xf32>
    %c0_5 = arith.constant 0 : index
    %c0_6 = arith.constant 0 : index
    %6 = vector.load %arg4[%c0_5, %c0_6] : memref<1x128xf32, #tpu.memory_space<vmem>>, vector<1x128xf32>
    %7 = vector.broadcast %6 : vector<1x128xf32> to vector<256x128xf32>
    %8 = arith.addf %5, %7 : vector<256x128xf32>
    %cst_7 = arith.constant 0.000000e+00 : f32
    %9 = vector.broadcast %cst_7 : f32 to vector<256x128xf32>
    %10 = arith.maximumf %8, %9 : vector<256x128xf32>
    %c0_8 = arith.constant 0 : index
    %c0_9 = arith.constant 0 : index
    %11 = vector.load %arg5[%c0_8, %c0_9] : memref<256x128xf32, #tpu.memory_space<vmem>>, vector<256x128xf32>
    tpu.vector_store %arg5[%c0_8, %c0_9], %10 {strides = array<i32>} : memref<256x128xf32, #tpu.memory_space<vmem>>, vector<256x128xf32>,
    return
  }
  func.func @transform_0(%arg0: i32) -> (i32, i32) {
    %c0_i32 = arith.constant 0 : i32
    %c0_i32_0 = arith.constant 0 : i32
    return %arg0, %c0_i32 : i32, i32
  }
  func.func @transform_1(%arg0: i32) -> (i32, i32) {
    %c0_i32 = arith.constant 0 : i32
    %c0_i32_0 = arith.constant 0 : i32
    %c0_i32_1 = arith.constant 0 : i32
    return %c0_i32, %c0_i32_0 : i32, i32
  }
  func.func @transform_2(%arg0: i32) -> (i32, i32) {
    %c0_i32 = arith.constant 0 : i32
    %c0_i32_0 = arith.constant 0 : i32
    %c0_i32_1 = arith.constant 0 : i32
    return %c0_i32, %c0_i32_0 : i32, i32
  }
  func.func @transform_3(%arg0: i32) -> (i32, i32) {
    %c0_i32 = arith.constant 0 : i32
    %c0_i32_0 = arith.constant 0 : i32
    %c0_i32_1 = arith.constant 0 : i32
    return %c0_i32, %c0_i32_0 : i32, i32
  }
  func.func @transform_4(%arg0: i32) -> (i32, i32) {
    %c0_i32 = arith.constant 0 : i32
    %c0_i32_0 = arith.constant 0 : i32
    return %arg0, %c0_i32 : i32, i32
  }
}

</mosaic_0001>

<llo_original>
// kernel: tile.11
$region0: #{tile.11}
  %s0 = inlined_call_operand.vmem [shape: f32[4,32], index: 0, kind: input, shape index: {}]
  %s1 = inlined_call_operand.vmem [shape: f32[1,128], index: 1, kind: output, shape index: {}]
  $region1: #{tile.11} parent=0
    #allocation0 [shape = 'u8[4096]{0}', space=vmem, size = 0x1000, scoped, tag = 'scoped mem for output reshape']
    #allocation1 [shape = 'u8[4096]{0}', space=vmem, size = 0x1000, scoped, tag = 'scoped mem for input reshape']
    %s3 = ssub.s32 16, 1
    %v4 = vld [vmem:[%s0] sm:%s3]
    %5 = vst [vmem:[#allocation1] sm:%s3] %v4
    %v6 = vld [vmem:[#allocation1] sm:$0x1]
    %vm7 = vcmask 261120
    %8 = vst.msk [vmem:[#allocation0] sm:$0x1] %vm7, %v6
    %s9 = scalar_lea.vmem [#allocation1], 3
    %v10 = vld [vmem:[%s9] sm:$0x1]
    %11 = vrot.lane.b32.xlu0 %v10, 96
    %v12 = vpop.permute.xlu0 %11
    %vm13 = vcmask 1048320
    %14 = vst.msk [vmem:[#allocation0] sm:$0x1] %vm13, %v12
    %s15 = scalar_lea.vmem [#allocation1], 2
    %v16 = vld [vmem:[%s15] sm:$0x1]
    %17 = vrot.lane.b32.xlu0 %v16, 64
    %v18 = vpop.permute.xlu0 %17
    %vm19 = vcmask 785920
    %20 = vst.msk [vmem:[#allocation0] sm:$0x1] %vm19, %v18
    %s21 = scalar_lea.vmem [#allocation1], 1
    %v22 = vld [vmem:[%s21] sm:$0x1]
    %23 = vrot.lane.b32.xlu0 %v22, 32
    %v24 = vpop.permute.xlu0 %23
    %vm25 = vcmask 523520
    %26 = vst.msk [vmem:[#allocation0] sm:$0x1] %vm25, %v24
    %s28 = ssub.s32 2, 1
    %v29 = vld [vmem:[#allocation0] sm:%s28]
    %s31 = ssub.s32 2, 1
    %32 = vst [vmem:[%s1] sm:%s31] %v29

// kernel: tile.10
$region0: #{tile.10}
  #allocation0 [shape = 's32[1]{0}', space=sflag, size = 0x4, scoped, tag = 'scoped memory for tile.10']
  %s0 = inlined_call_operand.vmem [shape: f32[32], index: 0, kind: input, shape index: {}]
  %s1 = inlined_call_operand.vmem [shape: f32[4,32], index: 1, kind: output, shape index: {}]
  // Predicated region
  $region2: #{tile.10} parent=0 // pred_check
    _
  $region3: #{tile.10} parent=0 // pred_check_branch
    %3 = sbr.rel (0) target = $region5
  $region4: #{tile.10} parent=0 // pred_region
    _
  $region5: #{tile.10} parent=0 // pred_fallthru
    _
  %v4 = vld [vmem:[%s0] ss:$0 sm:$0xff]
  %5 = vst [vmem:[%s1] sm:$0xf] %v4

// kernel: _lambda_.1
$region0: #{_lambda_.1}
  #allocation0 [shape = 'u32[]', space=smem, size = 0x4, offset = 0x4, fixed_abs, tag = 'smem constant byte address 0x4 - core index']
  #allocation1 [shape = 'u32[72,128]{1,0:T(1,128)}', space=vmem, size = 0x9000, scoped, tag = 'internal scratch']
  %s0 = inlined_call_operand.vmem [shape: bf16[512,72], index: 0, kind: input, shape index: {}]
  %s1 = inlined_call_operand.vmem [shape: bf16[72,128], index: 1, kind: input, shape index: {}]
  %s2 = inlined_call_operand.vmem [shape: f32[1,128], index: 2, kind: input, shape index: {}]
  %s3 = inlined_call_operand.vmem [shape: f32[1,128], index: 3, kind: input, shape index: {}]
  %s4 = inlined_call_operand.vmem [shape: f32[512,128], index: 4, kind: output, shape index: {}]
  %s5 = sld [smem:[#allocation0]]
  $region49: #{_lambda_.1} parent=0
    _
  %s7 = ssub.s32 1, %s5
  %s8 = scalar_select 0, %s7, %s5
  loop: start=0, step=1, limit=4
  $region2: #{_lambda_.1} parent=0 // loop_pre_header
    _
  $region3: #{_lambda_.1} parent=0 // loop_header
    %s10 = sphi 0, %s14
    %p11 = scmp.ge.s32.totalorder %s10, 4
    %s20 = sphi 0, %s22
    %s23 = sphi 0, %s20
    %s24 = sphi 0, %s23
    %s40 = sphi 0, %s24
    %s44 = sphi 0, %s44
    %s46 = sphi 0, %s44
    %s47 = sphi 0, %s46
    %s61 = sphi 0, %s47
    %s65 = sphi 0, %s65
    %s67 = sphi 0, %s65
    %s68 = sphi 0, %s67
    %s82 = sphi 0, %s68
    %s86 = sphi 0, %s86
    %s88 = sphi 0, %s86
    %s89 = sphi 0, %s88
    %s103 = sphi 0, %s89
    %s109 = sphi 0, %s111
    %s112 = sphi 0, %s109
    %s113 = sphi 0, %s112
    %s129 = sphi 0, %s113
  $region4: #{_lambda_.1} parent=0 // loop_header_branch
    %13 = sbr.rel (%p11) target = $region8
  $region5: #{_lambda_.1} parent=0 // loop_body
    %s15 = ssub.s32 %s10, 1
    %s16 = ssub.s32 %s10, 2
    %s17 = sadd.s32 %s10, 1
    %s18 = ssub.s32 %s10, %s17
    %p19 = scmp.eq.s32.totalorder %s18, 0
    %s21 = sadd.s32 %s20, 1
    %s22 = scalar_select %p19, %s20, %s21
    %p25 = pneg %p19
    %p26 = scmp.eq.s32.totalorder %s10, 1
    %p27 = por %p25, %p26
    %p28 = scmp.ne.s32.totalorder %s20, %s23
    %p29 = scmp.eq.s32.totalorder %s10, 0
    %p30 = por %p28, %p29
    %p31 = scmp.ne.s32.totalorder %s20, %s23
    %p32 = scmp.eq.s32.totalorder %s15, 1
    %p33 = por %p31, %p32
    %p34 = scmp.ne.s32.totalorder %s23, %s24
    %p35 = scmp.eq.s32.totalorder %s15, 0
    %p36 = por %p34, %p35
    %p37 = scmp.ne.s32.totalorder %s23, %s24
    %p38 = scmp.eq.s32.totalorder %s16, 1
    %p39 = por %p37, %p38
    %p41 = scmp.ne.s32.totalorder %s24, %s40
    %p42 = scmp.eq.s32.totalorder %s16, 0
    %p43 = por %p41, %p42
    %s45 = sadd.s32 %s44, 1
    %p48 = scmp.eq.s32.totalorder %s10, 1
    %p49 = scmp.ne.s32.totalorder %s44, %s46
    %p50 = scmp.eq.s32.totalorder %s10, 0
    %p51 = por %p49, %p50
    %p52 = scmp.ne.s32.totalorder %s44, %s46
    %p53 = scmp.eq.s32.totalorder %s15, 1
    %p54 = por %p52, %p53
    %p55 = scmp.ne.s32.totalorder %s46, %s47
    %p56 = scmp.eq.s32.totalorder %s15, 0
    %p57 = por %p55, %p56
    %p58 = scmp.ne.s32.totalorder %s46, %s47
    %p59 = scmp.eq.s32.totalorder %s16, 1
    %p60 = por %p58, %p59
    %p62 = scmp.ne.s32.totalorder %s47, %s61
    %p63 = scmp.eq.s32.totalorder %s16, 0
    %p64 = por %p62, %p63
    %s66 = sadd.s32 %s65, 1
    %p69 = scmp.eq.s32.totalorder %s10, 1
    %p70 = scmp.ne.s32.totalorder %s65, %s67
    %p71 = scmp.eq.s32.totalorder %s10, 0
    %p72 = por %p70, %p71
    %p73 = scmp.ne.s32.totalorder %s65, %s67
    %p74 = scmp.eq.s32.totalorder %s15, 1
    %p75 = por %p73, %p74
    %p76 = scmp.ne.s32.totalorder %s67, %s68
    %p77 = scmp.eq.s32.totalorder %s15, 0
    %p78 = por %p76, %p77
    %p79 = scmp.ne.s32.totalorder %s67, %s68
    %p80 = scmp.eq.s32.totalorder %s16, 1
    %p81 = por %p79, %p80
    %p83 = scmp.ne.s32.totalorder %s68, %s82
    %p84 = scmp.eq.s32.totalorder %s16, 0
    %p85 = por %p83, %p84
    %s87 = sadd.s32 %s86, 1
    %p90 = scmp.eq.s32.totalorder %s10, 1
    %p91 = scmp.ne.s32.totalorder %s86, %s88
    %p92 = scmp.eq.s32.totalorder %s10, 0
    %p93 = por %p91, %p92
    %p94 = scmp.ne.s32.totalorder %s86, %s88
    %p95 = scmp.eq.s32.totalorder %s15, 1
    %p96 = por %p94, %p95
    %p97 = scmp.ne.s32.totalorder %s88, %s89
    %p98 = scmp.eq.s32.totalorder %s15, 0
    %p99 = por %p97, %p98
    %p100 = scmp.ne.s32.totalorder %s88, %s89
    %p101 = scmp.eq.s32.totalorder %s16, 1
    %p102 = por %p100, %p101
    %p104 = scmp.ne.s32.totalorder %s89, %s103
    %p105 = scmp.eq.s32.totalorder %s16, 0
    %p106 = por %p104, %p105
    %s107 = ssub.s32 %s10, %s17
    %p108 = scmp.eq.s32.totalorder %s107, 0
    %s110 = sadd.s32 %s109, 1
    %s111 = scalar_select %p108, %s109, %s110
    %p114 = pneg %p108
    %p115 = scmp.eq.s32.totalorder %s10, 1
    %p116 = por %p114, %p115
    %p117 = scmp.ne.s32.totalorder %s109, %s112
    %p118 = scmp.eq.s32.totalorder %s10, 0
    %p119 = por %p117, %p118
    %p120 = scmp.ne.s32.totalorder %s109, %s112
    %p121 = scmp.eq.s32.totalorder %s15, 1
    %p122 = por %p120, %p121
    %p123 = scmp.ne.s32.totalorder %s112, %s113
    %p124 = scmp.eq.s32.totalorder %s15, 0
    %p125 = por %p123, %p124
    %p126 = scmp.ne.s32.totalorder %s112, %s113
    %p127 = scmp.eq.s32.totalorder %s16, 1
    %p128 = por %p126, %p127
    %p130 = scmp.ne.s32.totalorder %s113, %s129
    %p131 = scmp.eq.s32.totalorder %s16, 0
    %p132 = por %p130, %p131
    %p133 = scmp.le.s32.totalorder 1, %s10
    %p134 = scmp.lt.s32.totalorder %s10, 3
    %p135 = pnand %p133, %p134
    %p136 = pneg %p135
    // Predicated region
    $region9: #{_lambda_.1} parent=5 // pred_check
      _
    $region10: #{_lambda_.1} parent=5 // pred_check_branch
      %138 = sbr.rel (%p135) target = $region12
    $region11: #{_lambda_.1} parent=5 // pred_region
      %s139 = ssub.s32 %s10, 1
      // Predicated region
      $region13: #{_lambda_.1} parent=11 // pred_check
        %p140 = pneg %p57
      $region14: #{_lambda_.1} parent=11 // pred_check_branch
        %142 = sbr.rel (%p140) target = $region16
      $region15: #{_lambda_.1} parent=11 // pred_region
        _
      $region16: #{_lambda_.1} parent=11 // pred_fallthru
        _
      // Predicated region
      $region17: #{_lambda_.1} parent=11 // pred_check
        %p143 = pneg %p78
      $region18: #{_lambda_.1} parent=11 // pred_check_branch
        %145 = sbr.rel (%p143) target = $region20
      $region19: #{_lambda_.1} parent=11 // pred_region
        _
      $region20: #{_lambda_.1} parent=11 // pred_fallthru
        _
      // Predicated region
      $region21: #{_lambda_.1} parent=11 // pred_check
        %p146 = pneg %p99
      $region22: #{_lambda_.1} parent=11 // pred_check_branch
        %148 = sbr.rel (%p146) target = $region24
      $region23: #{_lambda_.1} parent=11 // pred_region
        _
      $region24: #{_lambda_.1} parent=11 // pred_fallthru
        _
    $region12: #{_lambda_.1} parent=5 // pred_fallthru
      _
    %p149 = scmp.lt.s32.totalorder %s10, 2
    // Predicated region
    $region25: #{_lambda_.1} parent=5 // pred_check
      %p150 = pneg %p149
    $region26: #{_lambda_.1} parent=5 // pred_check_branch
      %152 = sbr.rel (%p150) target = $region28
    $region27: #{_lambda_.1} parent=5 // pred_region
      // Predicated region
      $region29: #{_lambda_.1} parent=27 // pred_check
        %p153 = pneg %p30
      $region30: #{_lambda_.1} parent=27 // pred_check_branch
        %155 = sbr.rel (%p153) target = $region32
      $region31: #{_lambda_.1} parent=27 // pred_region
        %s156 = smul.u32 32, %s10
        %p157 = scmp.lt.s32.totalorder %s156, 63
        %s158 = scalar_select %p157, %s156, 63
        %s159 = smul.addr %s158, 4
        %s160 = scalar_lea.vmem %s0, %s159
        %s161 = smul.u32 32, %s10
      $region32: #{_lambda_.1} parent=27 // pred_fallthru
        _
    $region28: #{_lambda_.1} parent=5 // pred_fallthru
      _
    %p162 = scmp.le.s32.totalorder 1, %s10
    %p163 = scmp.lt.s32.totalorder %s10, 3
    %p164 = pnand %p162, %p163
    %p165 = pneg %p164
    // Predicated region
    $region33: #{_lambda_.1} parent=5 // pred_check
      _
    $region34: #{_lambda_.1} parent=5 // pred_check_branch
      %167 = sbr.rel (%p164) target = $region36
    $region35: #{_lambda_.1} parent=5 // pred_region
      %s168 = ssub.s32 %s10, 1
      %s169 = smul.u32 32, %s15
      %p170 = scmp.lt.s32.totalorder %s169, 63
      %s171 = scalar_select %p170, %s169, 63
      %s172 = smul.addr %s171, 4
      %s173 = scalar_lea.vmem %s0, %s172
      %p174 = pneg %p36
      %p175 = pneg %p33
      %p176 = pneg %p57
      %p177 = pneg %p54
      %p178 = pneg %p78
      %p179 = pneg %p75
      %p180 = pneg %p99
      %p181 = pneg %p96
      %p182 = pneg %p125
      %p183 = pneg %p122
      %s184 = smul.u32 32, %s15
      %p185 = scmp.lt.s32.totalorder %s184, 63
      %s186 = scalar_select %p185, %s184, 63
      %s187 = smul.addr %s186, 8
      %s188 = scalar_lea.vmem %s4, %s187
      %s189 = smul.u32 32, %s15
      %p190 = scmp.lt.s32.totalorder %s189, 63
      %s191 = scalar_select %p190, %s189, 63
      %s192 = smul.addr %s191, 4
      %s193 = scalar_lea.vmem %s0, %s192
      %s194 = smul.u32 32, %s15
      %s195 = smul.u32 32, %s15
      %p196 = scmp.lt.s32.totalorder %s195, 63
      %s197 = scalar_select %p196, %s195, 63
      %s198 = smul.addr %s197, 8
      %s199 = scalar_lea.vmem %s4, %s198
      %s200 = smul.u32 32, %s15
      %v202 = vld [vmem:[%s193] sm:$0xf]
      %v203 = vld [vmem:[%s193 + $0x4] sm:$0xf]
      %v204 = vld [vmem:[%s193 + $0x8] sm:$0xf]
      %v205 = vld [vmem:[%s193 + $0xc] sm:$0xf]
      %v206 = vld [vmem:[%s193 + $0x10] sm:$0xf]
      %v207 = vld [vmem:[%s193 + $0x14] sm:$0xf]
      %v208 = vld [vmem:[%s193 + $0x18] sm:$0xf]
      %v209 = vld [vmem:[%s193 + $0x1c] sm:$0xf]
      %v210 = vld [vmem:[%s193 + $0x20] sm:$0xf]
      %v211 = vld [vmem:[%s193 + $0x24] sm:$0xf]
      %v212 = vld [vmem:[%s193 + $0x28] sm:$0xf]
      %v213 = vld [vmem:[%s193 + $0x2c] sm:$0xf]
      %v214 = vld [vmem:[%s193 + $0x30] sm:$0xf]
      %v215 = vld [vmem:[%s193 + $0x34] sm:$0xf]
      %v216 = vld [vmem:[%s193 + $0x38] sm:$0xf]
      %v217 = vld [vmem:[%s193 + $0x3c] sm:$0xf]
      %v218 = vld [vmem:[%s193 + $0x40] sm:$0xf]
      %v219 = vld [vmem:[%s193 + $0x44] sm:$0xf]
      %v220 = vld [vmem:[%s193 + $0x48] sm:$0xf]
      %v221 = vld [vmem:[%s193 + $0x4c] sm:$0xf]
      %v222 = vld [vmem:[%s193 + $0x50] sm:$0xf]
      %v223 = vld [vmem:[%s193 + $0x54] sm:$0xf]
      %v224 = vld [vmem:[%s193 + $0x58] sm:$0xf]
      %v225 = vld [vmem:[%s193 + $0x5c] sm:$0xf]
      %v226 = vld [vmem:[%s193 + $0x60] sm:$0xf]
      %v227 = vld [vmem:[%s193 + $0x64] sm:$0xf]
      %v228 = vld [vmem:[%s193 + $0x68] sm:$0xf]
      %v229 = vld [vmem:[%s193 + $0x6c] sm:$0xf]
      %v230 = vld [vmem:[%s193 + $0x70] sm:$0xf]
      %v231 = vld [vmem:[%s193 + $0x74] sm:$0xf]
      %v232 = vld [vmem:[%s193 + $0x78] sm:$0xf]
      %v233 = vld [vmem:[%s193 + $0x7c] sm:$0xf]
      %v234 = vld [vmem:[%s1] sm:$0xf]
      %v235 = vld [vmem:[%s1 + $0x4] sm:$0xf]
      %v236 = vld [vmem:[%s1 + $0x8] sm:$0xf]
      %v237 = vld [vmem:[%s1 + $0xc] sm:$0xf]
      %v238 = vld [vmem:[%s1 + $0x10] sm:$0xf]
      %v239 = vld [vmem:[%s1 + $0x14] sm:$0xf]
      %v240 = vld [vmem:[%s1 + $0x18] sm:$0xf]
      %v241 = vld [vmem:[%s1 + $0x1c] sm:$0xf]
      %v242 = vld [vmem:[%s1 + $0x20] sm:$0xf]
      %v275 = vunpack.c.l.b16 %v202
      %v276 = vunpack.c.l.b16 %v203
      %v277 = vunpack.c.l.b16 %v204
      %v278 = vunpack.c.l.b16 %v205
      %v279 = vunpack.c.l.b16 %v206
      %v280 = vunpack.c.l.b16 %v207
      %v281 = vunpack.c.l.b16 %v208
      %v282 = vunpack.c.l.b16 %v209
      %v283 = vunpack.c.l.b16 %v210
      %v284 = vunpack.c.l.b16 %v211
      %v285 = vunpack.c.l.b16 %v212
      %v286 = vunpack.c.l.b16 %v213
      %v287 = vunpack.c.l.b16 %v214
      %v288 = vunpack.c.l.b16 %v215
      %v289 = vunpack.c.l.b16 %v216
      %v290 = vunpack.c.l.b16 %v217
      %v291 = vunpack.c.l.b16 %v218
      %v292 = vunpack.c.l.b16 %v219
      %v293 = vunpack.c.l.b16 %v220
      %v294 = vunpack.c.l.b16 %v221
      %v295 = vunpack.c.l.b16 %v222
      %v296 = vunpack.c.l.b16 %v223
      %v297 = vunpack.c.l.b16 %v224
      %v298 = vunpack.c.l.b16 %v225
      %v299 = vunpack.c.l.b16 %v226
      %v300 = vunpack.c.l.b16 %v227
      %v301 = vunpack.c.l.b16 %v228
      %v302 = vunpack.c.l.b16 %v229
      %v303 = vunpack.c.l.b16 %v230
      %v304 = vunpack.c.l.b16 %v231
      %v305 = vunpack.c.l.b16 %v232
      %v306 = vunpack.c.l.b16 %v233
      %v307 = vpack.c.b16 %v276, %v275
      %v308 = vpack.c.b16 %v278, %v277
      %v309 = vpack.c.b16 %v280, %v279
      %v310 = vpack.c.b16 %v282, %v281
      %v311 = vpack.c.b16 %v284, %v283
      %v312 = vpack.c.b16 %v286, %v285
      %v313 = vpack.c.b16 %v288, %v287
      %v314 = vpack.c.b16 %v290, %v289
      %v315 = vpack.c.b16 %v292, %v291
      %v316 = vpack.c.b16 %v294, %v293
      %v317 = vpack.c.b16 %v296, %v295
      %v318 = vpack.c.b16 %v298, %v297
      %v319 = vpack.c.b16 %v300, %v299
      %v320 = vpack.c.b16 %v302, %v301
      %v321 = vpack.c.b16 %v304, %v303
      %v322 = vpack.c.b16 %v306, %v305
      %v332 = vunpack.c.l.b16 %v234
      %v333 = vunpack.c.l.b16 %v235
      %v334 = vunpack.c.l.b16 %v236
      %v335 = vunpack.c.l.b16 %v237
      %v336 = vunpack.c.l.b16 %v238
      %v337 = vunpack.c.l.b16 %v239
      %v338 = vunpack.c.l.b16 %v240
      %v339 = vunpack.c.l.b16 %v241
      %v340 = vunpack.c.l.b16 %v242
      %v341 = vpack.c.b16 %v333, %v332
      %v342 = vpack.c.b16 %v335, %v334
      %v343 = vpack.c.b16 %v337, %v336
      %v344 = vpack.c.b16 %v339, %v338
      %v345 = vpack.c.b16 %v340, %v340
      %vm350 = vcmask 588800
      %v352 = vsel %vm350, %v307, 0
      %v355 = vsel %vm350, %v308, 0
      %v358 = vsel %vm350, %v309, 0
      %v361 = vsel %vm350, %v310, 0
      %v364 = vsel %vm350, %v311, 0
      %v367 = vsel %vm350, %v312, 0
      %v370 = vsel %vm350, %v313, 0
      %v373 = vsel %vm350, %v314, 0
      %v376 = vsel %vm350, %v315, 0
      %v379 = vsel %vm350, %v316, 0
      %v382 = vsel %vm350, %v317, 0
      %v385 = vsel %vm350, %v318, 0
      %v388 = vsel %vm350, %v319, 0
      %v391 = vsel %vm350, %v320, 0
      %v394 = vsel %vm350, %v321, 0
      %v397 = vsel %vm350, %v322, 0
      %vm399 = vcmask 1043456
      %v401 = vsel %vm399, %v345, 0
      %403 = vmatpush.bf16.msra.mxu0 0
      %404 = vmatpush.bf16.msra.mxu0 0
      %405 = vmatpush.bf16.msra.mxu0 0
      %406 = vmatpush.bf16.msra.mxu0 %v401
      %407 = vmatpush.bf16.msra.mxu0 %v344
      %408 = vmatpush.bf16.msra.mxu0 %v343
      %409 = vmatpush.bf16.msra.mxu0 %v342
      %410 = vmatpush.bf16.msra.mxu0 %v341
      %411 = vmatmul.bf16.gmra.mxu0 %v352
      %v412 = vpop.f32.mrf.mxu0
      %v413 = vadd.f32 0.0, %v412
      %v414 = vpop.f32.mrf.mxu0
      %v415 = vadd.f32 0.0, %v414
      %416 = vmatmul.bf16.gmra.mxu0 %v355
      %v417 = vpop.f32.mrf.mxu0
      %v418 = vadd.f32 0.0, %v417
      %v419 = vpop.f32.mrf.mxu0
      %v420 = vadd.f32 0.0, %v419
      %421 = vmatmul.bf16.gmra.mxu0 %v358
      %v422 = vpop.f32.mrf.mxu0
      %v423 = vadd.f32 0.0, %v422
      %v424 = vpop.f32.mrf.mxu0
      %v425 = vadd.f32 0.0, %v424
      %426 = vmatmul.bf16.gmra.mxu0 %v361
      %v427 = vpop.f32.mrf.mxu0
      %v428 = vadd.f32 0.0, %v427
      %v429 = vpop.f32.mrf.mxu0
      %v430 = vadd.f32 0.0, %v429
      %431 = vmatmul.bf16.gmra.mxu0 %v364
      %v432 = vpop.f32.mrf.mxu0
      %v433 = vadd.f32 0.0, %v432
      %v434 = vpop.f32.mrf.mxu0
      %v435 = vadd.f32 0.0, %v434
      %436 = vmatmul.bf16.gmra.mxu0 %v367
      %v437 = vpop.f32.mrf.mxu0
      %v438 = vadd.f32 0.0, %v437
      %v439 = vpop.f32.mrf.mxu0
      %v440 = vadd.f32 0.0, %v439
      %441 = vmatmul.bf16.gmra.mxu0 %v370
      %v442 = vpop.f32.mrf.mxu0
      %v443 = vadd.f32 0.0, %v442
      %v444 = vpop.f32.mrf.mxu0
      %v445 = vadd.f32 0.0, %v444
      %446 = vmatmul.bf16.gmra.mxu0 %v373
      %v447 = vpop.f32.mrf.mxu0
      %v448 = vadd.f32 0.0, %v447
      %v449 = vpop.f32.mrf.mxu0
      %v450 = vadd.f32 0.0, %v449
      %451 = vmatmul.bf16.gmra.mxu0 %v376
      %v452 = vpop.f32.mrf.mxu0
      %v453 = vadd.f32 0.0, %v452
      %v454 = vpop.f32.mrf.mxu0
      %v455 = vadd.f32 0.0, %v454
      %456 = vmatmul.bf16.gmra.mxu0 %v379
      %v457 = vpop.f32.mrf.mxu0
      %v458 = vadd.f32 0.0, %v457
      %v459 = vpop.f32.mrf.mxu0
      %v460 = vadd.f32 0.0, %v459
      %461 = vmatmul.bf16.gmra.mxu0 %v382
      %v462 = vpop.f32.mrf.mxu0
      %v463 = vadd.f32 0.0, %v462
      %v464 = vpop.f32.mrf.mxu0
      %v465 = vadd.f32 0.0, %v464
      %466 = vmatmul.bf16.gmra.mxu0 %v385
      %v467 = vpop.f32.mrf.mxu0
      %v468 = vadd.f32 0.0, %v467
      %v469 = vpop.f32.mrf.mxu0
      %v470 = vadd.f32 0.0, %v469
      %471 = vmatmul.bf16.gmra.mxu0 %v388
      %v472 = vpop.f32.mrf.mxu0
      %v473 = vadd.f32 0.0, %v472
      %v474 = vpop.f32.mrf.mxu0
      %v475 = vadd.f32 0.0, %v474
      %476 = vmatmul.bf16.gmra.mxu0 %v391
      %v477 = vpop.f32.mrf.mxu0
      %v478 = vadd.f32 0.0, %v477
      %v479 = vpop.f32.mrf.mxu0
      %v480 = vadd.f32 0.0, %v479
      %481 = vmatmul.bf16.gmra.mxu0 %v394
      %v482 = vpop.f32.mrf.mxu0
      %v483 = vadd.f32 0.0, %v482
      %v484 = vpop.f32.mrf.mxu0
      %v485 = vadd.f32 0.0, %v484
      %486 = vmatmul.bf16.gmra.mxu0 %v397
      %v487 = vpop.f32.mrf.mxu0
      %v488 = vadd.f32 0.0, %v487
      %v489 = vpop.f32.mrf.mxu0
      %v490 = vadd.f32 0.0, %v489
      %491 = vdwg.mxu0
      %v492 = vld [vmem:[%s2] sm:$0x1]
      %v494 = vperm.slane %v492, 0
      %v496 = vmul.f32 %v413, %v494
      %v497 = vmul.f32 %v415, %v494
      %v498 = vmul.f32 %v418, %v494
      %v499 = vmul.f32 %v420, %v494
      %v500 = vmul.f32 %v423, %v494
      %v501 = vmul.f32 %v425, %v494
      %v502 = vmul.f32 %v428, %v494
      %v503 = vmul.f32 %v430, %v494
      %v504 = vmul.f32 %v433, %v494
      %v505 = vmul.f32 %v435, %v494
      %v506 = vmul.f32 %v438, %v494
      %v507 = vmul.f32 %v440, %v494
      %v508 = vmul.f32 %v443, %v494
      %v509 = vmul.f32 %v445, %v494
      %v510 = vmul.f32 %v448, %v494
      %v511 = vmul.f32 %v450, %v494
      %v512 = vmul.f32 %v453, %v494
      %v513 = vmul.f32 %v455, %v494
      %v514 = vmul.f32 %v458, %v494
      %v515 = vmul.f32 %v460, %v494
      %v516 = vmul.f32 %v463, %v494
      %v517 = vmul.f32 %v465, %v494
      %v518 = vmul.f32 %v468, %v494
      %v519 = vmul.f32 %v470, %v494
      %v520 = vmul.f32 %v473, %v494
      %v521 = vmul.f32 %v475, %v494
      %v522 = vmul.f32 %v478, %v494
      %v523 = vmul.f32 %v480, %v494
      %v524 = vmul.f32 %v483, %v494
      %v525 = vmul.f32 %v485, %v494
      %v526 = vmul.f32 %v488, %v494
      %v527 = vmul.f32 %v490, %v494
      %v528 = vld [vmem:[%s3] sm:$0x1]
      %v530 = vperm.slane %v528, 0
      %v532 = vadd.f32 %v496, %v530
      %v533 = vadd.f32 %v497, %v530
      %v534 = vadd.f32 %v498, %v530
      %v535 = vadd.f32 %v499, %v530
      %v536 = vadd.f32 %v500, %v530
      %v537 = vadd.f32 %v501, %v530
      %v538 = vadd.f32 %v502, %v530
      %v539 = vadd.f32 %v503, %v530
      %v540 = vadd.f32 %v504, %v530
      %v541 = vadd.f32 %v505, %v530
      %v542 = vadd.f32 %v506, %v530
      %v543 = vadd.f32 %v507, %v530
      %v544 = vadd.f32 %v508, %v530
      %v545 = vadd.f32 %v509, %v530
      %v546 = vadd.f32 %v510, %v530
      %v547 = vadd.f32 %v511, %v530
      %v548 = vadd.f32 %v512, %v530
      %v549 = vadd.f32 %v513, %v530
      %v550 = vadd.f32 %v514, %v530
      %v551 = vadd.f32 %v515, %v530
      %v552 = vadd.f32 %v516, %v530
      %v553 = vadd.f32 %v517, %v530
      %v554 = vadd.f32 %v518, %v530
      %v555 = vadd.f32 %v519, %v530
      %v556 = vadd.f32 %v520, %v530
      %v557 = vadd.f32 %v521, %v530
      %v558 = vadd.f32 %v522, %v530
      %v559 = vadd.f32 %v523, %v530
      %v560 = vadd.f32 %v524, %v530
      %v561 = vadd.f32 %v525, %v530
      %v562 = vadd.f32 %v526, %v530
      %v563 = vadd.f32 %v527, %v530
      %v564 = vmax.f32 %v532, 0.0
      %v565 = vmax.f32 %v533, 0.0
      %v566 = vmax.f32 %v534, 0.0
      %v567 = vmax.f32 %v535, 0.0
      %v568 = vmax.f32 %v536, 0.0
      %v569 = vmax.f32 %v537, 0.0
      %v570 = vmax.f32 %v538, 0.0
      %v571 = vmax.f32 %v539, 0.0
      %v572 = vmax.f32 %v540, 0.0
      %v573 = vmax.f32 %v541, 0.0
      %v574 = vmax.f32 %v542, 0.0
      %v575 = vmax.f32 %v543, 0.0
      %v576 = vmax.f32 %v544, 0.0
      %v577 = vmax.f32 %v545, 0.0
      %v578 = vmax.f32 %v546, 0.0
      %v579 = vmax.f32 %v547, 0.0
      %v580 = vmax.f32 %v548, 0.0
      %v581 = vmax.f32 %v549, 0.0
      %v582 = vmax.f32 %v550, 0.0
      %v583 = vmax.f32 %v551, 0.0
      %v584 = vmax.f32 %v552, 0.0
      %v585 = vmax.f32 %v553, 0.0
      %v586 = vmax.f32 %v554, 0.0
      %v587 = vmax.f32 %v555, 0.0
      %v588 = vmax.f32 %v556, 0.0
      %v589 = vmax.f32 %v557, 0.0
      %v590 = vmax.f32 %v558, 0.0
      %v591 = vmax.f32 %v559, 0.0
      %v592 = vmax.f32 %v560, 0.0
      %v593 = vmax.f32 %v561, 0.0
      %v594 = vmax.f32 %v562, 0.0
      %v595 = vmax.f32 %v563, 0.0
      %596 = vst [vmem:[%s199] sm:$0xff] %v564
      %597 = vst [vmem:[%s199 + $0x8] sm:$0xff] %v565
      %598 = vst [vmem:[%s199 + $0x10] sm:$0xff] %v566
      %599 = vst [vmem:[%s199 + $0x18] sm:$0xff] %v567
      %600 = vst [vmem:[%s199 + $0x20] sm:$0xff] %v568
      %601 = vst [vmem:[%s199 + $0x28] sm:$0xff] %v569
      %602 = vst [vmem:[%s199 + $0x30] sm:$0xff] %v570
      %603 = vst [vmem:[%s199 + $0x38] sm:$0xff] %v571
      %604 = vst [vmem:[%s199 + $0x40] sm:$0xff] %v572
      %605 = vst [vmem:[%s199 + $0x48] sm:$0xff] %v573
      %606 = vst [vmem:[%s199 + $0x50] sm:$0xff] %v574
      %607 = vst [vmem:[%s199 + $0x58] sm:$0xff] %v575
      %608 = vst [vmem:[%s199 + $0x60] sm:$0xff] %v576
      %609 = vst [vmem:[%s199 + $0x68] sm:$0xff] %v577
      %610 = vst [vmem:[%s199 + $0x70] sm:$0xff] %v578
      %611 = vst [vmem:[%s199 + $0x78] sm:$0xff] %v579
      %612 = vst [vmem:[%s199 + $0x80] sm:$0xff] %v580
      %613 = vst [vmem:[%s199 + $0x88] sm:$0xff] %v581
      %614 = vst [vmem:[%s199 + $0x90] sm:$0xff] %v582
      %615 = vst [vmem:[%s199 + $0x98] sm:$0xff] %v583
      %616 = vst [vmem:[%s199 + $0xa0] sm:$0xff] %v584
      %617 = vst [vmem:[%s199 + $0xa8] sm:$0xff] %v585
      %618 = vst [vmem:[%s199 + $0xb0] sm:$0xff] %v586
      %619 = vst [vmem:[%s199 + $0xb8] sm:$0xff] %v587
      %620 = vst [vmem:[%s199 + $0xc0] sm:$0xff] %v588
      %621 = vst [vmem:[%s199 + $0xc8] sm:$0xff] %v589
      %622 = vst [vmem:[%s199 + $0xd0] sm:$0xff] %v590
      %623 = vst [vmem:[%s199 + $0xd8] sm:$0xff] %v591
      %624 = vst [vmem:[%s199 + $0xe0] sm:$0xff] %v592
      %625 = vst [vmem:[%s199 + $0xe8] sm:$0xff] %v593
      %626 = vst [vmem:[%s199 + $0xf0] sm:$0xff] %v594
      %627 = vst [vmem:[%s199 + $0xf8] sm:$0xff] %v595
      %s628 = smul.u32 32, %s15
      %p629 = scmp.lt.s32.totalorder %s628, 63
      %s630 = scalar_select %p629, %s628, 63
      %s631 = smul.addr %s630, 8
      %s632 = scalar_lea.vmem %s4, %s631
      // Predicated region
      $region37: #{_lambda_.1} parent=35 // pred_check
        %p633 = pneg %p122
      $region38: #{_lambda_.1} parent=35 // pred_check_branch
        %635 = sbr.rel (%p633) target = $region40
      $region39: #{_lambda_.1} parent=35 // pred_region
        %s636 = smul.u32 32, %s15
      $region40: #{_lambda_.1} parent=35 // pred_fallthru
        _
    $region36: #{_lambda_.1} parent=5 // pred_fallthru
      _
    %p637 = scmp.le.s32.totalorder 2, %s10
    // Predicated region
    $region41: #{_lambda_.1} parent=5 // pred_check
      %p638 = pneg %p637
    $region42: #{_lambda_.1} parent=5 // pred_check_branch
      %640 = sbr.rel (%p638) target = $region44
    $region43: #{_lambda_.1} parent=5 // pred_region
      %s641 = ssub.s32 %s10, 2
      // Predicated region
      $region45: #{_lambda_.1} parent=43 // pred_check
        %p642 = pneg %p128
      $region46: #{_lambda_.1} parent=43 // pred_check_branch
        %644 = sbr.rel (%p642) target = $region48
      $region47: #{_lambda_.1} parent=43 // pred_region
        %s645 = smul.u32 32, %s16
        %p646 = scmp.lt.s32.totalorder %s645, 63
        %s647 = scalar_select %p646, %s645, 63
        %s648 = smul.addr %s647, 8
        %s649 = scalar_lea.vmem %s4, %s648
      $region48: #{_lambda_.1} parent=43 // pred_fallthru
        _
    $region44: #{_lambda_.1} parent=5 // pred_fallthru
      _
  $region6: #{_lambda_.1} parent=0 // loop_footer
    %s14 = sadd.s32 1, %s10
  $region7: #{_lambda_.1} parent=0 // loop_footer_branch
    %9 = sbr.rel target = $region3
  $region8: #{_lambda_.1} parent=0 // loop_exit
    _

</llo_original>
